<compile_context>
chip_gen: v7x
topology: tpu7x:2x2x1
jax: 0.10.0
libtpu: 0.0.40
codegen_flags: <defaults>
</compile_context>

<pallas_src>
import functools
import inspect

import jax
import jax.numpy as jnp
from jax.experimental import pallas as pl
from jax.experimental.pallas import tpu as pltpu


def _round_up(x, mult):
    return ((x + mult - 1) // mult) * mult


def _sublane(itemsize):
    # Second-minor tiling granularity per dtype width.
    return {4: 8, 2: 16, 1: 32}.get(itemsize, 8)


def _padded_tile_bytes(rows, cols, itemsize):
    """Bytes a (rows, cols) buffer actually occupies in VMEM (tiled layout)."""
    return (_round_up(max(rows, 1), _sublane(itemsize))
            * _round_up(max(cols, 1), 128) * itemsize)


def _supports_pipeline_mode():
    if not hasattr(pl, "Buffered"):
        return False
    try:
        return "pipeline_mode" in inspect.signature(pl.BlockSpec).parameters
    except (TypeError, ValueError):
        return False


# Flipped to False at runtime if the installed Mosaic rejects single-buffering.
_SINGLE_BUFFER_OK = _supports_pipeline_mode()


def _vmem_budget_and_limit():
    """Chip-derived VMEM budget (tile sizing) and compiler vmem limit."""
    cap = 64 * 1024 * 1024  # conservative (v7x-safe) fallback
    try:
        info = pltpu.get_tpu_info()
        cap = int(getattr(info, "vmem_capacity_bytes", cap)) or cap
    except Exception:
        pass
    return int(0.70 * cap), int(0.80 * cap)


def _commutative_matmul_kernel(x_ref, w1t_ref, w2t_ref, o_ref):
    # x_ref:   (TB, in_dim)
    # w1t_ref: (in_dim, 2*r_pad)   [W1[:r].T | W1[r:].T], each half lane-padded
    # w2t_ref: (r_pad, out_dim)    W2.T with zero-padded contraction rows
    # o_ref:   (TB, out_dim)
    r_pad = w2t_ref.shape[0]
    h = jnp.dot(x_ref[...], w1t_ref[...], preferred_element_type=jnp.float32)
    # Gate: split at a 128-lane (vreg) boundary -> free; pure VPU multiply in f32.
    z = (h[:, :r_pad] * h[:, r_pad:]).astype(w2t_ref.dtype)
    o_ref[...] = jnp.dot(
        z, w2t_ref[...], preferred_element_type=jnp.float32
    ).astype(o_ref.dtype)


def prepare_weights(w1, w2):
    """One-time weight prep (transpose / split / fuse / pad), outside the hot path.

    w1: (2r, in_dim)  PyTorch nn.Linear layout for layer1
    w2: (n*p, r)      PyTorch nn.Linear layout for layer2
    Returns (w1_t, w2t, r):
      w1_t: (in_dim, 2*r_pad)  = [W1[:r].T | W1[r:].T], zero-padded per half
      w2t:  (r_pad,  n*p)      = W2.T with zero-padded contraction rows
    """
    out_dim, r = w2.shape
    r_pad = _round_up(max(r, 128), 128)
    w1a_t = jnp.pad(w1[:r].T, ((0, 0), (0, r_pad - r)))
    w1b_t = jnp.pad(w1[r:].T, ((0, 0), (0, r_pad - r)))
    w1_t = jnp.concatenate((w1a_t, w1b_t), axis=1)        # (in_dim, 2*r_pad)
    w2t = jnp.pad(w2.T, ((0, r_pad - r), (0, 0)))          # (r_pad, out_dim)
    return w1_t, w2t, r


def _pick_block_b(B, in_dim, out_dim, r_pad, itemsize, vmem_budget,
                  single_buffer_weights):
    """Largest lane/sublane-aware batch tile that fits the chip's VMEM budget."""
    sub = _sublane(itemsize)
    wbuf = 1 if single_buffer_weights else 2
    w_bytes = wbuf * (_padded_tile_bytes(in_dim, 2 * r_pad, itemsize)
                      + _padded_tile_bytes(r_pad, out_dim, itemsize))

    def tile_bytes(tb):
        return (2 * _padded_tile_bytes(tb, in_dim, itemsize)     # x   (double-buffered)
                + 2 * _padded_tile_bytes(tb, out_dim, itemsize)  # out (double-buffered)
                + _padded_tile_bytes(tb, 2 * r_pad, 4)           # h   (f32)
                + _padded_tile_bytes(tb, r_pad, itemsize)        # z
                + _padded_tile_bytes(tb, out_dim, 4))            # layer-2 f32 result

    if B <= sub:
        return B
    # Keep >= 2 grid steps when the batch allows it so the "parallel" axis can
    # shard across both v7x TensorCores (harmless on single-TC chips).
    cap = _round_up(pl.cdiv(B, 2), sub) if B >= 2 * sub else B
    cap = min(cap, 4096)
    tb = cap
    while tb > sub and w_bytes + tile_bytes(tb) > vmem_budget:
        tb -= sub
    # MXU / lane-friendly alignment for big tiles.
    if tb >= 512:
        tb = (tb // 256) * 256
    elif tb >= 128:
        tb = (tb // 128) * 128
    else:
        tb = max(sub, (tb // sub) * sub)
    return min(tb, B)


@functools.partial(
    jax.jit,
    static_argnames=("block_b", "vmem_limit", "single_buffer_weights", "r"))
def _forward_impl(x, w1_t, w2t, *, block_b, vmem_limit, single_buffer_weights, r):
    B, in_dim = x.shape
    r_pad, out_dim = w2t.shape
    itemsize = jnp.dtype(x.dtype).itemsize
    grid = (pl.cdiv(B, block_b),)

    resident_kwargs = {}
    if single_buffer_weights:
        resident_kwargs["pipeline_mode"] = pl.Buffered(1)

    in_specs = [
        pl.BlockSpec((block_b, in_dim), lambda i: (i, 0)),
        pl.BlockSpec((in_dim, 2 * r_pad), lambda i: (0, 0), **resident_kwargs),
        pl.BlockSpec((r_pad, out_dim), lambda i: (0, 0), **resident_kwargs),
    ]
    out_spec = pl.BlockSpec((block_b, out_dim), lambda i: (i, 0))

    # Cost estimate from the REAL problem sizes (not the padded ones).
    flops = 2 * B * in_dim * (2 * r) + B * r + 2 * B * r * out_dim
    bytes_accessed = ((x.size + w1_t.size + w2t.size) * itemsize
                      + B * out_dim * itemsize)

    return pl.pallas_call(
        _commutative_matmul_kernel,
        out_shape=jax.ShapeDtypeStruct((B, out_dim), x.dtype),
        grid_spec=pltpu.PrefetchScalarGridSpec(
            num_scalar_prefetch=0,
            grid=grid,
            in_specs=in_specs,
            out_specs=out_spec,
        ),
        compiler_params=pltpu.CompilerParams(
            dimension_semantics=("parallel",),
            vmem_limit_bytes=vmem_limit,
        ),
        cost_estimate=pl.CostEstimate(
            flops=flops, transcendentals=0, bytes_accessed=bytes_accessed),
    )(x, w1_t, w2t)


def commutative_matmul_forward(x, w1_t, w2t, *, r=None, block_b=None):
    """x: (B, n*m + m*p); weights pre-prepared via prepare_weights()."""
    global _SINGLE_BUFFER_OK
    B, _in_dim = x.shape
    r_pad, out_dim = w2t.shape
    if r is None:
        r = r_pad
    itemsize = jnp.dtype(x.dtype).itemsize
    sub = _sublane(itemsize)

    vmem_budget, vmem_limit = _vmem_budget_and_limit()
    if block_b is None:
        block_b = _pick_block_b(B, _in_dim, out_dim, r_pad, itemsize,
                                vmem_budget, _SINGLE_BUFFER_OK)
    block_b = int(block_b)
    if block_b >= B:
        block_b = B
    else:
        block_b = max(sub, (block_b // sub) * sub)

    kwargs = dict(block_b=block_b, vmem_limit=vmem_limit, r=int(r))
    try:
        return _forward_impl(x, w1_t, w2t,
                             single_buffer_weights=_SINGLE_BUFFER_OK, **kwargs)
    except Exception:
        if not _SINGLE_BUFFER_OK:
            raise
        # Installed Pallas rejected single-buffered resident weights; fall back
        # to the default double-buffered specs and remember.
        _SINGLE_BUFFER_OK = False
        return _forward_impl(x, w1_t, w2t,
                             single_buffer_weights=False, **kwargs)


def init_params(key, n, m, p, r, dtype=jnp.float32):
    """Deterministic init mimicking nn.Linear default (uniform +-1/sqrt(fan_in))."""
    k1, k2 = jax.random.split(key)
    in1 = n * m + m * p
    b1 = 1.0 / (in1 ** 0.5)
    w1 = jax.random.uniform(k1, (2 * r, in1), dtype, minval=-b1, maxval=b1)
    b2 = 1.0 / (r ** 0.5)
    w2 = jax.random.uniform(k2, (n * p, r), dtype, minval=-b2, maxval=b2)
    return w1, w2


def reference_forward(x, w1, w2, r):
    h = x @ w1.T
    z = h[:, :r] * h[:, r:]
    return z @ w2.T


if __name__ == "__main__":
    n, m, p, r = 2, 3, 2, 8

    key = jax.random.PRNGKey(0)
    k_params, k_a, k_b = jax.random.split(key, 3)

    w1, w2 = init_params(k_params, n, m, p, r)
    w1_t, w2t, r_real = prepare_weights(w1, w2)

    def make_input(batch, ka, kb):
        a = jax.random.normal(ka, (batch, n, m), jnp.float32)
        b = jax.random.normal(kb, (batch, m, p), jnp.float32)
        return jnp.concatenate(
            (a.reshape(batch, -1), b.reshape(batch, -1)), axis=1)

    # 1) Small batch: single grid step, full-array blocks.
    x = make_input(2, k_a, k_b)
    out = jax.block_until_ready(
        commutative_matmul_forward(x, w1_t, w2t, r=r_real))
    ref = reference_forward(x, w1, w2, r)
    assert out.shape == (2, n * p), out.shape
    assert jnp.allclose(out, ref, atol=1e-5, rtol=1e-5), float(
        jnp.max(jnp.abs(out - ref)))

    # 2) Larger batch: auto-picked tile -> >= 2 "parallel" grid steps.
    k_a2, k_b2 = jax.random.split(jax.random.PRNGKey(1))
    x2 = make_input(64, k_a2, k_b2)
    out2 = jax.block_until_ready(
        commutative_matmul_forward(x2, w1_t, w2t, r=r_real))
    ref2 = reference_forward(x2, w1, w2, r)
    assert out2.shape == (64, n * p), out2.shape
    assert jnp.allclose(out2, ref2, atol=1e-5, rtol=1e-5), float(
        jnp.max(jnp.abs(out2 - ref2)))

    # 3) bf16 streaming path (x / weights bf16, f32 accumulation & gate math).
    w1_bf = w1.astype(jnp.bfloat16)
    w2_bf = w2.astype(jnp.bfloat16)
    w1_t_bf, w2t_bf, _ = prepare_weights(w1_bf, w2_bf)
    x2_bf = x2.astype(jnp.bfloat16)
    out3 = jax.block_until_ready(
        commutative_matmul_forward(x2_bf, w1_t_bf, w2t_bf, r=r_real))
    ref3 = reference_forward(x2_bf.astype(jnp.float32),
                             w1_bf.astype(jnp.float32),
                             w2_bf.astype(jnp.float32), r)
    assert out3.shape == (64, n * p), out3.shape
    assert jnp.allclose(out3.astype(jnp.float32), ref3, atol=8e-2, rtol=8e-2), \
        float(jnp.max(jnp.abs(out3.astype(jnp.float32) - ref3)))

    print("KERNEL_OK")
</pallas_src>

<mosaic_0001>
module attributes {stable_mosaic.version = 11 : i64} {
  func.func @_commutative_matmul_kernel(%arg0: i32, %arg1: memref<2x12xf32, #tpu.memory_space<vmem>>, %arg2: memref<12x256xf32, #tpu.memory_space<vmem>>, %arg3: memref<128x4xf32, #tpu.memory_space<vmem>>, %arg4: memref<2x4xf32, #tpu.memory_space<vmem>>) attributes {dimension_semantics = [#tpu.dimension_semantics<parallel>], iteration_bounds = array<i64: 1>, scalar_prefetch = 0 : i64, scratch_operands = 0 : i64, tpu.core_type = #tpu.core_type<tc>, window_params = [{transform_indices = @transform_0, window_bounds = array<i64: 2, 12>}, {pipeline_mode = #tpu.pipeline_mode<synchronous>, transform_indices = @transform_1, window_bounds = array<i64: 12, 256>}, {pipeline_mode = #tpu.pipeline_mode<synchronous>, transform_indices = @transform_2, window_bounds = array<i64: 128, 4>}, {transform_indices = @transform_3, window_bounds = array<i64: 2, 4>}]} {
    %c0 = arith.constant 0 : index
    %c0_0 = arith.constant 0 : index
    %0 = vector.load %arg1[%c0, %c0_0] : memref<2x12xf32, #tpu.memory_space<vmem>>, vector<2x12xf32>
    %c0_1 = arith.constant 0 : index
    %c0_2 = arith.constant 0 : index
    %1 = vector.load %arg2[%c0_1, %c0_2] : memref<12x256xf32, #tpu.memory_space<vmem>>, vector<12x256xf32>
    %cst = arith.constant dense<0.000000e+00> : vector<2x256xf32>
    %2 = tpu.matmul %0, %1, %cst {dimension_numbers = #tpu.dot_dimension_numbers<[1], [0], [0], [1], [0, 0, 1, 1], [], []>} : vector<2x12xf32>, vector<12x256xf32>, vector<2x256xf32> -> vector<2x256xf32>
    %3 = vector.extract_strided_slice %2 {offsets = [0, 0], sizes = [2, 128], strides = [1, 1]} : vector<2x256xf32> to vector<2x128xf32>
    %4 = vector.extract_strided_slice %2 {offsets = [0, 128], sizes = [2, 128], strides = [1, 1]} : vector<2x256xf32> to vector<2x128xf32>
    %5 = arith.mulf %3, %4 : vector<2x128xf32>
    %c0_3 = arith.constant 0 : index
    %c0_4 = arith.constant 0 : index
    %6 = vector.load %arg3[%c0_3, %c0_4] : memref<128x4xf32, #tpu.memory_space<vmem>>, vector<128x4xf32>
    %cst_5 = arith.constant dense<0.000000e+00> : vector<2x4xf32>
    %7 = tpu.matmul %5, %6, %cst_5 {dimension_numbers = #tpu.dot_dimension_numbers<[1], [0], [0], [1], [0, 0, 1, 1], [], []>} : vector<2x128xf32>, vector<128x4xf32>, vector<2x4xf32> -> vector<2x4xf32>
    %c0_6 = arith.constant 0 : index
    %c0_7 = arith.constant 0 : index
    %8 = vector.load %arg4[%c0_6, %c0_7] : memref<2x4xf32, #tpu.memory_space<vmem>>, vector<2x4xf32>
    tpu.vector_store %arg4[%c0_6, %c0_7], %7 {strides = array<i32>} : memref<2x4xf32, #tpu.memory_space<vmem>>, vector<2x4xf32>,
    return
  }
  func.func @transform_0(%arg0: i32) -> (i32, i32) {
    %c0_i32 = arith.constant 0 : i32
    %c0_i32_0 = arith.constant 0 : i32
    return %arg0, %c0_i32 : i32, i32
  }
  func.func @transform_1(%arg0: i32) -> (i32, i32) {
    %c0_i32 = arith.constant 0 : i32
    %c0_i32_0 = arith.constant 0 : i32
    %c0_i32_1 = arith.constant 0 : i32
    return %c0_i32, %c0_i32_0 : i32, i32
  }
  func.func @transform_2(%arg0: i32) -> (i32, i32) {
    %c0_i32 = arith.constant 0 : i32
    %c0_i32_0 = arith.constant 0 : i32
    %c0_i32_1 = arith.constant 0 : i32
    return %c0_i32, %c0_i32_0 : i32, i32
  }
  func.func @transform_3(%arg0: i32) -> (i32, i32) {
    %c0_i32 = arith.constant 0 : i32
    %c0_i32_0 = arith.constant 0 : i32
    return %arg0, %c0_i32 : i32, i32
  }
}

module attributes {stable_mosaic.version = 11 : i64} {
  func.func @_commutative_matmul_kernel(%arg0: i32, %arg1: memref<2x12xf32, #tpu.memory_space<vmem>>, %arg2: memref<12x256xf32, #tpu.memory_space<vmem>>, %arg3: memref<128x4xf32, #tpu.memory_space<vmem>>, %arg4: memref<2x4xf32, #tpu.memory_space<vmem>>) attributes {dimension_semantics = [#tpu.dimension_semantics<parallel>], iteration_bounds = array<i64: 1>, scalar_prefetch = 0 : i64, scratch_operands = 0 : i64, tpu.core_type = #tpu.core_type<tc>, window_params = [{transform_indices = @transform_0, window_bounds = array<i64: 2, 12>}, {pipeline_mode = #tpu.pipeline_mode<synchronous>, transform_indices = @transform_1, window_bounds = array<i64: 12, 256>}, {pipeline_mode = #tpu.pipeline_mode<synchronous>, transform_indices = @transform_2, window_bounds = array<i64: 128, 4>}, {transform_indices = @transform_3, window_bounds = array<i64: 2, 4>}]} {
    %c0 = arith.constant 0 : index
    %c0_0 = arith.constant 0 : index
    %0 = vector.load %arg1[%c0, %c0_0] : memref<2x12xf32, #tpu.memory_space<vmem>>, vector<2x12xf32>
    %c0_1 = arith.constant 0 : index
    %c0_2 = arith.constant 0 : index
    %1 = vector.load %arg2[%c0_1, %c0_2] : memref<12x256xf32, #tpu.memory_space<vmem>>, vector<12x256xf32>
    %cst = arith.constant dense<0.000000e+00> : vector<2x256xf32>
    %2 = tpu.matmul %0, %1, %cst {dimension_numbers = #tpu.dot_dimension_numbers<[1], [0], [0], [1], [0, 0, 1, 1], [], []>} : vector<2x12xf32>, vector<12x256xf32>, vector<2x256xf32> -> vector<2x256xf32>
    %3 = vector.extract_strided_slice %2 {offsets = [0, 0], sizes = [2, 128], strides = [1, 1]} : vector<2x256xf32> to vector<2x128xf32>
    %4 = vector.extract_strided_slice %2 {offsets = [0, 128], sizes = [2, 128], strides = [1, 1]} : vector<2x256xf32> to vector<2x128xf32>
    %5 = arith.mulf %3, %4 : vector<2x128xf32>
    %c0_3 = arith.constant 0 : index
    %c0_4 = arith.constant 0 : index
    %6 = vector.load %arg3[%c0_3, %c0_4] : memref<128x4xf32, #tpu.memory_space<vmem>>, vector<128x4xf32>
    %cst_5 = arith.constant dense<0.000000e+00> : vector<2x4xf32>
    %7 = tpu.matmul %5, %6, %cst_5 {dimension_numbers = #tpu.dot_dimension_numbers<[1], [0], [0], [1], [0, 0, 1, 1], [], []>} : vector<2x128xf32>, vector<128x4xf32>, vector<2x4xf32> -> vector<2x4xf32>
    %c0_6 = arith.constant 0 : index
    %c0_7 = arith.constant 0 : index
    %8 = vector.load %arg4[%c0_6, %c0_7] : memref<2x4xf32, #tpu.memory_space<vmem>>, vector<2x4xf32>
    tpu.vector_store %arg4[%c0_6, %c0_7], %7 {strides = array<i32>} : memref<2x4xf32, #tpu.memory_space<vmem>>, vector<2x4xf32>,
    return
  }
  func.func @transform_0(%arg0: i32) -> (i32, i32) {
    %c0_i32 = arith.constant 0 : i32
    %c0_i32_0 = arith.constant 0 : i32
    return %arg0, %c0_i32 : i32, i32
  }
  func.func @transform_1(%arg0: i32) -> (i32, i32) {
    %c0_i32 = arith.constant 0 : i32
    %c0_i32_0 = arith.constant 0 : i32
    %c0_i32_1 = arith.constant 0 : i32
    return %c0_i32, %c0_i32_0 : i32, i32
  }
  func.func @transform_2(%arg0: i32) -> (i32, i32) {
    %c0_i32 = arith.constant 0 : i32
    %c0_i32_0 = arith.constant 0 : i32
    %c0_i32_1 = arith.constant 0 : i32
    return %c0_i32, %c0_i32_0 : i32, i32
  }
  func.func @transform_3(%arg0: i32) -> (i32, i32) {
    %c0_i32 = arith.constant 0 : i32
    %c0_i32_0 = arith.constant 0 : i32
    return %arg0, %c0_i32 : i32, i32
  }
}

</mosaic_0001>

<llo_original>
// kernel: _forward_impl.1
$region0: #{_forward_impl.1}
  #allocation0 [shape = 'u32[]', space=smem, size = 0x4, offset = 0x4, fixed_abs, tag = 'smem constant byte address 0x4 - core index']
  #allocation1 [shape = 'u32[144,128]{1,0:T(1,128)}', space=vmem, size = 0x12000, scoped, tag = 'internal scratch']
  %s0 = inlined_call_operand.vmem [shape: f32[2,12], index: 0, kind: input, shape index: {}]
  %s1 = inlined_call_operand.vmem [shape: f32[12,256], index: 1, kind: input, shape index: {}]
  %s2 = inlined_call_operand.vmem [shape: f32[128,4], index: 2, kind: input, shape index: {}]
  %s3 = inlined_call_operand.hbm [shape: f32[2,4], index: 3, kind: output, shape index: {}]
  %s4 = sld [smem:[#allocation0]]
  $region22: #{_forward_impl.1} parent=0
    _
  %s6 = ssub.s32 1, %s4
  %s7 = scalar_select 0, %s6, %s4
  $region1: #{_forward_impl.1} parent=0
    #allocation2 [shape = 'u8[1024]{0}', space=vmem, size = 0x400, scoped, tag = 'output window, operand 0, single buffered']
    #allocation3 [shape = 's32[1]{0}', space=sflag, size = 0x4, scoped, tag = 'scoped memory for _forward_impl.1']
    %8 = vsyncpa [#allocation3], 0
    // Predicated region
    $region2: #{_forward_impl.1} parent=1 // pred_check
      _
    $region3: #{_forward_impl.1} parent=1 // pred_check_branch
      %10 = sbr.rel (0) target = $region5
    $region4: #{_forward_impl.1} parent=1 // pred_region
      _
    $region5: #{_forward_impl.1} parent=1 // pred_fallthru
      _
    // Predicated region
    $region6: #{_forward_impl.1} parent=1 // pred_check
      _
    $region7: #{_forward_impl.1} parent=1 // pred_check_branch
      %12 = sbr.rel (0) target = $region9
    $region8: #{_forward_impl.1} parent=1 // pred_region
      _
    $region9: #{_forward_impl.1} parent=1 // pred_fallthru
      _
    // Predicated region
    $region10: #{_forward_impl.1} parent=1 // pred_check
      _
    $region11: #{_forward_impl.1} parent=1 // pred_check_branch
      %14 = sbr.rel (0) target = $region13
    $region12: #{_forward_impl.1} parent=1 // pred_region
      _
    $region13: #{_forward_impl.1} parent=1 // pred_fallthru
      _
    %v15 = vld [vmem:[%s0] sm:$0x3]
    %v16 = vld [vmem:[%s1] sm:$0xff]
    %v17 = vld [vmem:[%s1 + $0x8] sm:$0xff]
    %v18 = vld [vmem:[%s1 + $0x10] sm:$0xf]
    %v19 = vld [vmem:[%s1 + $0x18] sm:$0xf]
    %vm20 = vcmask 97280
    %v22 = vsel %vm20, %v15, 0
    %vm24 = vcmask 1043456
    %v26 = vsel %vm24, %v18, 0
    %v29 = vsel %vm24, %v19, 0
    %31 = vmatprep.subr.mxu0 %v17
    %32 = vmatpush1.msra.mxu0 %v16
    %33 = vmatprep.subr.mxu0 %v29
    %34 = vmatpush1.msra.mxu0 %v26
    %35 = vmatprep.subr.mxu0 0.0
    %36 = vmatpush1.msra.mxu0 0.0
    %37 = vmatprep.subr.mxu0 0.0
    %38 = vmatpush1.msra.mxu0 0.0
    %39 = vmatprep.subr.mxu0 0.0
    %40 = vmatpush1.msra.mxu0 0.0
    %41 = vmatprep.subr.mxu0 0.0
    %42 = vmatpush1.msra.mxu0 0.0
    %43 = vmatprep.subr.mxu0 0.0
    %44 = vmatpush1.msra.mxu0 0.0
    %45 = vmatprep.subr.mxu0 0.0
    %46 = vmatpush1.msra.mxu0 0.0
    %47 = vmatprep.subr.mxu0 0.0
    %48 = vmatpush1.msra.mxu0 0.0
    %49 = vmatprep.subr.mxu0 0.0
    %50 = vmatpush1.msra.mxu0 0.0
    %51 = vmatprep.subr.mxu0 0.0
    %52 = vmatpush1.msra.mxu0 0.0
    %53 = vmatprep.subr.mxu0 0.0
    %54 = vmatpush1.msra.mxu0 0.0
    %55 = vmatprep.subr.mxu0 0.0
    %56 = vmatpush1.msra.mxu0 0.0
    %57 = vmatprep.subr.mxu0 0.0
    %58 = vmatpush1.msra.mxu0 0.0
    %59 = vmatprep.subr.mxu0 0.0
    %60 = vmatpush1.msra.mxu0 0.0
    %61 = vmatprep.subr.mxu0 0.0
    %62 = vmatpush1.msra.mxu0 0.0
    %63 = vmatprep.subr.mxu0 0.0
    %64 = vmatpush1.msra.mxu0 0.0
    %65 = vmatprep.subr.mxu0 0.0
    %66 = vmatpush1.msra.mxu0 0.0
    %67 = vmatprep.subr.mxu0 0.0
    %68 = vmatpush1.msra.mxu0 0.0
    %69 = vmatprep.subr.mxu0 0.0
    %70 = vmatpush1.msra.mxu0 0.0
    %71 = vmatprep.subr.mxu0 0.0
    %72 = vmatpush1.msra.mxu0 0.0
    %73 = vmatprep.subr.mxu0 0.0
    %74 = vmatpush1.msra.mxu0 0.0
    %75 = vmatprep.subr.mxu0 0.0
    %76 = vmatpush1.msra.mxu0 0.0
    %77 = vmatprep.subr.mxu0 0.0
    %78 = vmatpush1.msra.mxu0 0.0
    %79 = vmatprep.subr.mxu0 0.0
    %80 = vmatpush1.msra.mxu0 0.0
    %81 = vmatprep.subr.mxu0 0.0
    %82 = vmatpush1.msra.mxu0 0.0
    %83 = vmatprep.subr.mxu0 0.0
    %84 = vmatpush1.msra.mxu0 0.0
    %85 = vmatprep.subr.mxu0 0.0
    %86 = vmatpush1.msra.mxu0 0.0
    %87 = vmatprep.subr.mxu0 0.0
    %88 = vmatpush1.msra.mxu0 0.0
    %89 = vmatprep.subr.mxu0 0.0
    %90 = vmatpush1.msra.mxu0 0.0
    %91 = vmatprep.subr.mxu0 0.0
    %92 = vmatpush1.msra.mxu0 0.0
    %93 = vmatprep.subr.mxu0 0.0
    %94 = vmatpush1.msra.mxu0 0.0
    %95 = vmatprep.mubr.f32.mxu0 0.0
    %96 = vmatmul.mubr.f32.gmra.mrb[0].mxu0 %v22
    %v97 = vpop.f32.mrb[0].mxu0
    %v98 = vadd.f32 0.0, %v97
    %v99 = vpop.f32.mrb[0].mxu0
    %v100 = vadd.f32 0.0, %v99
    %101 = vdwg.mxu0
    %v102 = vmul.f32 %v98, %v100
    %v103 = vld [vmem:[%s2] sm:$0xff]
    %v104 = vld [vmem:[%s2 + $0x8] sm:$0xff]
    %v105 = vld [vmem:[%s2 + $0x10] sm:$0xff]
    %v106 = vld [vmem:[%s2 + $0x18] sm:$0xff]
    %v107 = vld [vmem:[%s2 + $0x20] sm:$0xff]
    %v108 = vld [vmem:[%s2 + $0x28] sm:$0xff]
    %v109 = vld [vmem:[%s2 + $0x30] sm:$0xff]
    %v110 = vld [vmem:[%s2 + $0x38] sm:$0xff]
    %v111 = vld [vmem:[%s2 + $0x40] sm:$0xff]
    %v112 = vld [vmem:[%s2 + $0x48] sm:$0xff]
    %v113 = vld [vmem:[%s2 + $0x50] sm:$0xff]
    %v114 = vld [vmem:[%s2 + $0x58] sm:$0xff]
    %v115 = vld [vmem:[%s2 + $0x60] sm:$0xff]
    %v116 = vld [vmem:[%s2 + $0x68] sm:$0xff]
    %v117 = vld [vmem:[%s2 + $0x70] sm:$0xff]
    %v118 = vld [vmem:[%s2 + $0x78] sm:$0xff]
    %119 = vmatprep.subr.mxu0 0.0
    %120 = vmatpush1.msra.mxu0 %v103
    %121 = vmatprep.subr.mxu0 0.0
    %122 = vmatpush1.msra.mxu0 %v104
    %123 = vmatprep.subr.mxu0 0.0
    %124 = vmatpush1.msra.mxu0 %v105
    %125 = vmatprep.subr.mxu0 0.0
    %126 = vmatpush1.msra.mxu0 %v106
    %127 = vmatprep.subr.mxu0 0.0
    %128 = vmatpush1.msra.mxu0 %v107
    %129 = vmatprep.subr.mxu0 0.0
    %130 = vmatpush1.msra.mxu0 %v108
    %131 = vmatprep.subr.mxu0 0.0
    %132 = vmatpush1.msra.mxu0 %v109
    %133 = vmatprep.subr.mxu0 0.0
    %134 = vmatpush1.msra.mxu0 %v110
    %135 = vmatprep.subr.mxu0 0.0
    %136 = vmatpush1.msra.mxu0 %v111
    %137 = vmatprep.subr.mxu0 0.0
    %138 = vmatpush1.msra.mxu0 %v112
    %139 = vmatprep.subr.mxu0 0.0
    %140 = vmatpush1.msra.mxu0 %v113
    %141 = vmatprep.subr.mxu0 0.0
    %142 = vmatpush1.msra.mxu0 %v114
    %143 = vmatprep.subr.mxu0 0.0
    %144 = vmatpush1.msra.mxu0 %v115
    %145 = vmatprep.subr.mxu0 0.0
    %146 = vmatpush1.msra.mxu0 %v116
    %147 = vmatprep.subr.mxu0 0.0
    %148 = vmatpush1.msra.mxu0 %v117
    %149 = vmatprep.subr.mxu0 0.0
    %150 = vmatpush1.msra.mxu0 %v118
    %151 = vmatprep.subr.mxu0 0.0
    %152 = vmatpush1.msra.mxu0 0.0
    %153 = vmatprep.subr.mxu0 0.0
    %154 = vmatpush1.msra.mxu0 0.0
    %155 = vmatprep.subr.mxu0 0.0
    %156 = vmatpush1.msra.mxu0 0.0
    %157 = vmatprep.subr.mxu0 0.0
    %158 = vmatpush1.msra.mxu0 0.0
    %159 = vmatprep.subr.mxu0 0.0
    %160 = vmatpush1.msra.mxu0 0.0
    %161 = vmatprep.subr.mxu0 0.0
    %162 = vmatpush1.msra.mxu0 0.0
    %163 = vmatprep.subr.mxu0 0.0
    %164 = vmatpush1.msra.mxu0 0.0
    %165 = vmatprep.subr.mxu0 0.0
    %166 = vmatpush1.msra.mxu0 0.0
    %167 = vmatprep.subr.mxu0 0.0
    %168 = vmatpush1.msra.mxu0 0.0
    %169 = vmatprep.subr.mxu0 0.0
    %170 = vmatpush1.msra.mxu0 0.0
    %171 = vmatprep.subr.mxu0 0.0
    %172 = vmatpush1.msra.mxu0 0.0
    %173 = vmatprep.subr.mxu0 0.0
    %174 = vmatpush1.msra.mxu0 0.0
    %175 = vmatprep.subr.mxu0 0.0
    %176 = vmatpush1.msra.mxu0 0.0
    %177 = vmatprep.subr.mxu0 0.0
    %178 = vmatpush1.msra.mxu0 0.0
    %179 = vmatprep.subr.mxu0 0.0
    %180 = vmatpush1.msra.mxu0 0.0
    %181 = vmatprep.subr.mxu0 0.0
    %182 = vmatpush1.msra.mxu0 0.0
    %183 = vmatprep.mubr.f32.mxu0 0.0
    %184 = vmatmul.mubr.f32.gmra.mrb[0].mxu0 %v102
    %v185 = vpop.f32.mrb[0].mxu0
    %v186 = vadd.f32 0.0, %v185
    %v187 = vpop.f32.mrb[0].mxu0
    %188 = vdwg.mxu0
    %vm189 = vcmask 25600
    %190 = vst.msk [vmem:[#allocation2] sm:$0x3] %vm189, %v186
    // Predicated region
    $region14: #{_forward_impl.1} parent=1 // pred_check
      _
    $region15: #{_forward_impl.1} parent=1 // pred_check_branch
      %192 = sbr.rel (0) target = $region17
    $region16: #{_forward_impl.1} parent=1 // pred_region
      %s194 = ssub.s32 32, 32
      %195 = vsyncadd [#allocation3], %s194
      %s197 = sshll.u32 [#allocation2], 4
      %s198 = int_to_ptr.vmem [resolvable:$true] %s197
      %200 = dma.vmem_to_hbm [thread:$0]  %s198, 32, %s3, [#allocation3]
    $region17: #{_forward_impl.1} parent=1 // pred_fallthru
      _
    // Predicated region
    $region18: #{_forward_impl.1} parent=1 // pred_check
      _
    $region19: #{_forward_impl.1} parent=1 // pred_check_branch
      %202 = sbr.rel (0) target = $region21
    $region20: #{_forward_impl.1} parent=1 // pred_region
      %203 = dma.done [#allocation3], 32
    $region21: #{_forward_impl.1} parent=1 // pred_fallthru
      _
    %204 = vsyncpa [#allocation3], 1

// kernel: _forward_impl.1
$region0: #{_forward_impl.1}
  #allocation0 [shape = 'u32[]', space=smem, size = 0x4, offset = 0x4, fixed_abs, tag = 'smem constant byte address 0x4 - core index']
  #allocation1 [shape = 'u32[144,128]{1,0:T(1,128)}', space=vmem, size = 0x12000, scoped, tag = 'internal scratch']
  %s0 = inlined_call_operand.vmem [shape: f32[2,12], index: 0, kind: input, shape index: {}]
  %s1 = inlined_call_operand.vmem [shape: f32[12,256], index: 1, kind: input, shape index: {}]
  %s2 = inlined_call_operand.vmem [shape: f32[128,4], index: 2, kind: input, shape index: {}]
  %s3 = inlined_call_operand.hbm [shape: f32[2,4], index: 3, kind: output, shape index: {}]
  %s4 = sld [smem:[#allocation0]]
  $region22: #{_forward_impl.1} parent=0
    _
  %s6 = ssub.s32 1, %s4
  %s7 = scalar_select 0, %s6, %s4
  $region1: #{_forward_impl.1} parent=0
    #allocation2 [shape = 'u8[1024]{0}', space=vmem, size = 0x400, scoped, tag = 'output window, operand 0, single buffered']
    #allocation3 [shape = 's32[1]{0}', space=sflag, size = 0x4, scoped, tag = 'scoped memory for _forward_impl.1']
    %8 = vsyncpa [#allocation3], 0
    // Predicated region
    $region2: #{_forward_impl.1} parent=1 // pred_check
      _
    $region3: #{_forward_impl.1} parent=1 // pred_check_branch
      %10 = sbr.rel (0) target = $region5
    $region4: #{_forward_impl.1} parent=1 // pred_region
      _
    $region5: #{_forward_impl.1} parent=1 // pred_fallthru
      _
    // Predicated region
    $region6: #{_forward_impl.1} parent=1 // pred_check
      _
    $region7: #{_forward_impl.1} parent=1 // pred_check_branch
      %12 = sbr.rel (0) target = $region9
    $region8: #{_forward_impl.1} parent=1 // pred_region
      _
    $region9: #{_forward_impl.1} parent=1 // pred_fallthru
      _
    // Predicated region
    $region10: #{_forward_impl.1} parent=1 // pred_check
      _
    $region11: #{_forward_impl.1} parent=1 // pred_check_branch
      %14 = sbr.rel (0) target = $region13
    $region12: #{_forward_impl.1} parent=1 // pred_region
      _
    $region13: #{_forward_impl.1} parent=1 // pred_fallthru
      _
    %v15 = vld [vmem:[%s0] sm:$0x3]
    %v16 = vld [vmem:[%s1] sm:$0xff]
    %v17 = vld [vmem:[%s1 + $0x8] sm:$0xff]
    %v18 = vld [vmem:[%s1 + $0x10] sm:$0xf]
    %v19 = vld [vmem:[%s1 + $0x18] sm:$0xf]
    %vm20 = vcmask 97280
    %v22 = vsel %vm20, %v15, 0
    %vm24 = vcmask 1043456
    %v26 = vsel %vm24, %v18, 0
    %v29 = vsel %vm24, %v19, 0
    %31 = vmatprep.subr.mxu0 %v17
    %32 = vmatpush1.msra.mxu0 %v16
    %33 = vmatprep.subr.mxu0 %v29
    %34 = vmatpush1.msra.mxu0 %v26
    %35 = vmatprep.subr.mxu0 0.0
    %36 = vmatpush1.msra.mxu0 0.0
    %37 = vmatprep.subr.mxu0 0.0
    %38 = vmatpush1.msra.mxu0 0.0
    %39 = vmatprep.subr.mxu0 0.0
    %40 = vmatpush1.msra.mxu0 0.0
    %41 = vmatprep.subr.mxu0 0.0
    %42 = vmatpush1.msra.mxu0 0.0
    %43 = vmatprep.subr.mxu0 0.0
    %44 = vmatpush1.msra.mxu0 0.0
    %45 = vmatprep.subr.mxu0 0.0
    %46 = vmatpush1.msra.mxu0 0.0
    %47 = vmatprep.subr.mxu0 0.0
    %48 = vmatpush1.msra.mxu0 0.0
    %49 = vmatprep.subr.mxu0 0.0
    %50 = vmatpush1.msra.mxu0 0.0
    %51 = vmatprep.subr.mxu0 0.0
    %52 = vmatpush1.msra.mxu0 0.0
    %53 = vmatprep.subr.mxu0 0.0
    %54 = vmatpush1.msra.mxu0 0.0
    %55 = vmatprep.subr.mxu0 0.0
    %56 = vmatpush1.msra.mxu0 0.0
    %57 = vmatprep.subr.mxu0 0.0
    %58 = vmatpush1.msra.mxu0 0.0
    %59 = vmatprep.subr.mxu0 0.0
    %60 = vmatpush1.msra.mxu0 0.0
    %61 = vmatprep.subr.mxu0 0.0
    %62 = vmatpush1.msra.mxu0 0.0
    %63 = vmatprep.subr.mxu0 0.0
    %64 = vmatpush1.msra.mxu0 0.0
    %65 = vmatprep.subr.mxu0 0.0
    %66 = vmatpush1.msra.mxu0 0.0
    %67 = vmatprep.subr.mxu0 0.0
    %68 = vmatpush1.msra.mxu0 0.0
    %69 = vmatprep.subr.mxu0 0.0
    %70 = vmatpush1.msra.mxu0 0.0
    %71 = vmatprep.subr.mxu0 0.0
    %72 = vmatpush1.msra.mxu0 0.0
    %73 = vmatprep.subr.mxu0 0.0
    %74 = vmatpush1.msra.mxu0 0.0
    %75 = vmatprep.subr.mxu0 0.0
    %76 = vmatpush1.msra.mxu0 0.0
    %77 = vmatprep.subr.mxu0 0.0
    %78 = vmatpush1.msra.mxu0 0.0
    %79 = vmatprep.subr.mxu0 0.0
    %80 = vmatpush1.msra.mxu0 0.0
    %81 = vmatprep.subr.mxu0 0.0
    %82 = vmatpush1.msra.mxu0 0.0
    %83 = vmatprep.subr.mxu0 0.0
    %84 = vmatpush1.msra.mxu0 0.0
    %85 = vmatprep.subr.mxu0 0.0
    %86 = vmatpush1.msra.mxu0 0.0
    %87 = vmatprep.subr.mxu0 0.0
    %88 = vmatpush1.msra.mxu0 0.0
    %89 = vmatprep.subr.mxu0 0.0
    %90 = vmatpush1.msra.mxu0 0.0
    %91 = vmatprep.subr.mxu0 0.0
    %92 = vmatpush1.msra.mxu0 0.0
    %93 = vmatprep.subr.mxu0 0.0
    %94 = vmatpush1.msra.mxu0 0.0
    %95 = vmatprep.mubr.f32.mxu0 0.0
    %96 = vmatmul.mubr.f32.gmra.mrb[0].mxu0 %v22
    %v97 = vpop.f32.mrb[0].mxu0
    %v98 = vadd.f32 0.0, %v97
    %v99 = vpop.f32.mrb[0].mxu0
    %v100 = vadd.f32 0.0, %v99
    %101 = vdwg.mxu0
    %v102 = vmul.f32 %v98, %v100
    %v103 = vld [vmem:[%s2] sm:$0xff]
    %v104 = vld [vmem:[%s2 + $0x8] sm:$0xff]
    %v105 = vld [vmem:[%s2 + $0x10] sm:$0xff]
    %v106 = vld [vmem:[%s2 + $0x18] sm:$0xff]
    %v107 = vld [vmem:[%s2 + $0x20] sm:$0xff]
    %v108 = vld [vmem:[%s2 + $0x28] sm:$0xff]
    %v109 = vld [vmem:[%s2 + $0x30] sm:$0xff]
    %v110 = vld [vmem:[%s2 + $0x38] sm:$0xff]
    %v111 = vld [vmem:[%s2 + $0x40] sm:$0xff]
    %v112 = vld [vmem:[%s2 + $0x48] sm:$0xff]
    %v113 = vld [vmem:[%s2 + $0x50] sm:$0xff]
    %v114 = vld [vmem:[%s2 + $0x58] sm:$0xff]
    %v115 = vld [vmem:[%s2 + $0x60] sm:$0xff]
    %v116 = vld [vmem:[%s2 + $0x68] sm:$0xff]
    %v117 = vld [vmem:[%s2 + $0x70] sm:$0xff]
    %v118 = vld [vmem:[%s2 + $0x78] sm:$0xff]
    %119 = vmatprep.subr.mxu0 0.0
    %120 = vmatpush1.msra.mxu0 %v103
    %121 = vmatprep.subr.mxu0 0.0
    %122 = vmatpush1.msra.mxu0 %v104
    %123 = vmatprep.subr.mxu0 0.0
    %124 = vmatpush1.msra.mxu0 %v105
    %125 = vmatprep.subr.mxu0 0.0
    %126 = vmatpush1.msra.mxu0 %v106
    %127 = vmatprep.subr.mxu0 0.0
    %128 = vmatpush1.msra.mxu0 %v107
    %129 = vmatprep.subr.mxu0 0.0
    %130 = vmatpush1.msra.mxu0 %v108
    %131 = vmatprep.subr.mxu0 0.0
    %132 = vmatpush1.msra.mxu0 %v109
    %133 = vmatprep.subr.mxu0 0.0
    %134 = vmatpush1.msra.mxu0 %v110
    %135 = vmatprep.subr.mxu0 0.0
    %136 = vmatpush1.msra.mxu0 %v111
    %137 = vmatprep.subr.mxu0 0.0
    %138 = vmatpush1.msra.mxu0 %v112
    %139 = vmatprep.subr.mxu0 0.0
    %140 = vmatpush1.msra.mxu0 %v113
    %141 = vmatprep.subr.mxu0 0.0
    %142 = vmatpush1.msra.mxu0 %v114
    %143 = vmatprep.subr.mxu0 0.0
    %144 = vmatpush1.msra.mxu0 %v115
    %145 = vmatprep.subr.mxu0 0.0
    %146 = vmatpush1.msra.mxu0 %v116
    %147 = vmatprep.subr.mxu0 0.0
    %148 = vmatpush1.msra.mxu0 %v117
    %149 = vmatprep.subr.mxu0 0.0
    %150 = vmatpush1.msra.mxu0 %v118
    %151 = vmatprep.subr.mxu0 0.0
    %152 = vmatpush1.msra.mxu0 0.0
    %153 = vmatprep.subr.mxu0 0.0
    %154 = vmatpush1.msra.mxu0 0.0
    %155 = vmatprep.subr.mxu0 0.0
    %156 = vmatpush1.msra.mxu0 0.0
    %157 = vmatprep.subr.mxu0 0.0
    %158 = vmatpush1.msra.mxu0 0.0
    %159 = vmatprep.subr.mxu0 0.0
    %160 = vmatpush1.msra.mxu0 0.0
    %161 = vmatprep.subr.mxu0 0.0
    %162 = vmatpush1.msra.mxu0 0.0
    %163 = vmatprep.subr.mxu0 0.0
    %164 = vmatpush1.msra.mxu0 0.0
    %165 = vmatprep.subr.mxu0 0.0
    %166 = vmatpush1.msra.mxu0 0.0
    %167 = vmatprep.subr.mxu0 0.0
    %168 = vmatpush1.msra.mxu0 0.0
    %169 = vmatprep.subr.mxu0 0.0
    %170 = vmatpush1.msra.mxu0 0.0
    %171 = vmatprep.subr.mxu0 0.0
    %172 = vmatpush1.msra.mxu0 0.0
    %173 = vmatprep.subr.mxu0 0.0
    %174 = vmatpush1.msra.mxu0 0.0
    %175 = vmatprep.subr.mxu0 0.0
    %176 = vmatpush1.msra.mxu0 0.0
    %177 = vmatprep.subr.mxu0 0.0
    %178 = vmatpush1.msra.mxu0 0.0
    %179 = vmatprep.subr.mxu0 0.0
    %180 = vmatpush1.msra.mxu0 0.0
    %181 = vmatprep.subr.mxu0 0.0
    %182 = vmatpush1.msra.mxu0 0.0
    %183 = vmatprep.mubr.f32.mxu0 0.0
    %184 = vmatmul.mubr.f32.gmra.mrb[0].mxu0 %v102
    %v185 = vpop.f32.mrb[0].mxu0
    %v186 = vadd.f32 0.0, %v185
    %v187 = vpop.f32.mrb[0].mxu0
    %188 = vdwg.mxu0
    %vm189 = vcmask 25600
    %190 = vst.msk [vmem:[#allocation2] sm:$0x3] %vm189, %v186
    // Predicated region
    $region14: #{_forward_impl.1} parent=1 // pred_check
      _
    $region15: #{_forward_impl.1} parent=1 // pred_check_branch
      %192 = sbr.rel (0) target = $region17
    $region16: #{_forward_impl.1} parent=1 // pred_region
      %s194 = ssub.s32 32, 32
      %195 = vsyncadd [#allocation3], %s194
      %s197 = sshll.u32 [#allocation2], 4
      %s198 = int_to_ptr.vmem [resolvable:$true] %s197
      %200 = dma.vmem_to_hbm [thread:$0]  %s198, 32, %s3, [#allocation3]
    $region17: #{_forward_impl.1} parent=1 // pred_fallthru
      _
    // Predicated region
    $region18: #{_forward_impl.1} parent=1 // pred_check
      _
    $region19: #{_forward_impl.1} parent=1 // pred_check_branch
      %202 = sbr.rel (0) target = $region21
    $region20: #{_forward_impl.1} parent=1 // pred_region
      %203 = dma.done [#allocation3], 32
    $region21: #{_forward_impl.1} parent=1 // pred_fallthru
      _
    %204 = vsyncpa [#allocation3], 1

</llo_original>
